<compile_context>
chip_gen: v6e
topology: v6e:2x2x1
jax: 0.10.0
libtpu: 0.0.40
codegen_flags: <defaults>
</compile_context>

<pallas_src>
import functools
import math

import jax
import jax.numpy as jnp
from jax.experimental import pallas as pl
from jax.experimental.pallas import tpu as pltpu

_LANE = 128
_TARGET_BLOCK_ELEMS = 2048 * _LANE   # ~1 MiB f32 per input per pipeline buffer
_MAX_WIDTH = 8192                    # cap for the ragged-width (R, W) path
_NUM_CORES = 2                       # v7x has 2 TCs; harmless on v5e/v6e


def _sublane_multiple(dtype) -> int:
    # Minimum second-minor tile multiple per dtype: f32 -> 8, bf16 -> 16, int8/bool -> 32.
    itemsize = jnp.dtype(dtype).itemsize
    return max(8, 32 // max(1, itemsize))


def _round_down(a: int, m: int) -> int:
    return (a // m) * m


def _plan_2d_view(shape):
    """Pick a copy-free 2-D (rows, width) view of a contiguous array, or None."""
    n = math.prod(shape) if len(shape) else 0
    if n == 0:
        return None
    if n % _LANE == 0:
        return n // _LANE, _LANE
    w = 1
    for d in reversed(shape):
        w *= int(d)
        if w >= _LANE:
            break
    if w < _LANE or w > _MAX_WIDTH:
        return None
    return n // w, w


def _dice_sums_kernel(t_ref, x_ref, out_ref, *, width, blocks_per_core,
                      total_blocks, rows_in_last, needs_gate):
    """Per-core partial sums.

    out_ref is a (3, 8, width) f32 block resident across the inner
    ("arbitrary") grid axis:
      out[0] = partial sums of sigmoid(x) * binarize(t)    (intersection)
      out[1] = partial sums of sigmoid(x)
      out[2] = partial sums of binarize(t)
    """
    c = pl.program_id(0)   # core / "parallel" axis
    i = pl.program_id(1)   # sequential reduction axis

    @pl.when(i == 0)
    def _():
        out_ref[...] = jnp.zeros(out_ref.shape, jnp.float32)

    def accum(valid_rows):
        x = x_ref[...].astype(jnp.float32)        # cast in-kernel: HBM stream stays narrow
        t = t_ref[...]
        # sigmoid via tanh: one EUP push per vreg instead of exp + reciprocal.
        s = 0.5 * jnp.tanh(0.5 * x) + 0.5
        tb = (t > 0).astype(jnp.float32)
        if valid_rows is not None:
            # Row-level validity for the over-tiled final block. Masking happens
            # BEFORE any accumulation so OOB garbage / NaN can never leak.
            row = jax.lax.broadcasted_iota(jnp.int32, s.shape, 0)
            ok = row < valid_rows
            s = jnp.where(ok, s, 0.0)
            tb = jnp.where(ok, tb, 0.0)

        def fold(v):
            # (block_rows, width) -> (8, width): layout-preserving sublane split
            # + leading-axis sum = pure VPU vreg adds; the cross-lane reduce
            # happens exactly once, in the wrapper.
            return jnp.sum(v.reshape(-1, 8, width), axis=0)

        out_ref[0] += fold(s * tb)
        out_ref[1] += fold(s)
        out_ref[2] += fold(tb)

    if not needs_gate:
        accum(None)                      # aligned case: no mask ops anywhere
    else:
        g = c * blocks_per_core + i      # global block index
        last = total_blocks - 1

        @pl.when(g < last)
        def _():
            accum(None)                  # steady state: unmasked

        @pl.when(g == last)
        def _():
            accum(rows_in_last)          # only the final block pays for masking
        # g > last: phantom block on the second core -> contributes nothing.


def dice_loss(targets, inputs, smooth=1.0):
    """Pallas implementation of DiceLoss.forward(targets, inputs, smooth)."""
    n = math.prod(inputs.shape)
    assert math.prod(targets.shape) == n, "targets/inputs must have the same numel"
    t_arr = targets.reshape(inputs.shape)          # free for contiguous arrays

    view = _plan_2d_view(inputs.shape)
    sub = max(_sublane_multiple(inputs.dtype), _sublane_multiple(t_arr.dtype))
    if view is None or view[0] < sub:
        # TODO(synk): tiny or extreme-width degenerate shapes fall back to plain
        # JAX (numerics identical to the PyTorch forward).
        return _dice_loss_ref(t_arr, inputs, smooth)

    rows, width = view
    x2 = inputs.reshape(rows, width)               # free (contiguous) -- no pad copies
    t2 = t_arr.reshape(rows, width)

    # Block rows: ~_TARGET_BLOCK_ELEMS per block, rounded to the dtype sublane
    # multiple, never exceeding the (rounded-down) row count -> blocks never
    # overhang the array by more than one partial (masked) block.
    desired = max(sub, _round_down(max(_TARGET_BLOCK_ELEMS // width, sub), sub))
    block_rows = min(desired, _round_down(rows, sub))
    total_blocks = pl.cdiv(rows, block_rows)

    num_cores = _NUM_CORES if total_blocks >= _NUM_CORES else 1
    bpc = pl.cdiv(total_blocks, num_cores)
    has_phantom = num_cores * bpc > total_blocks

    rows_in_last = rows - (total_blocks - 1) * block_rows
    masked_last = rows_in_last if rows_in_last != block_rows else None
    needs_gate = has_phantom or (masked_last is not None)

    def in_index(c, i):
        g = c * bpc + i
        if has_phantom:
            g = jnp.minimum(g, total_blocks - 1)   # keep phantom blocks in-bounds
        return (g, 0)

    in_spec = pl.BlockSpec((block_rows, width), in_index)
    out_spec = pl.BlockSpec((3, 8, width), lambda c, i: (c, 0, 0))

    kernel = functools.partial(
        _dice_sums_kernel,
        width=width,
        blocks_per_core=bpc,
        total_blocks=total_blocks,
        rows_in_last=masked_last,
        needs_gate=needs_gate,
    )

    partials = pl.pallas_call(
        kernel,
        out_shape=jax.ShapeDtypeStruct((3 * num_cores, 8, width), jnp.float32),
        grid_spec=pltpu.PrefetchScalarGridSpec(
            num_scalar_prefetch=0,
            grid=(num_cores, bpc),
            in_specs=[in_spec, in_spec],
            out_specs=out_spec,
        ),
        compiler_params=pltpu.CompilerParams(
            dimension_semantics=("parallel", "arbitrary"),
            vmem_limit_bytes=32 * 1024 * 1024,
        ),
    )(t2, x2)

    # Tiny finalize in plain JAX: sum per-core (8, width) partials + dice formula.
    sums = jnp.sum(partials.reshape(num_cores, 3, 8, width), axis=(0, 2, 3))
    inter, s_sum, t_sum = sums[0], sums[1], sums[2]
    smooth_f = jnp.asarray(smooth, jnp.float32)
    dice = (2.0 * inter + smooth_f) / (s_sum + t_sum + smooth_f)
    return (1.0 - dice).astype(jnp.float32)


def _dice_loss_ref(targets, inputs, smooth=1.0):
    """Pure-JAX reference mirroring the PyTorch forward."""
    s = jax.nn.sigmoid(inputs.reshape(-1).astype(jnp.float32))
    tb = (targets.reshape(-1) > 0).astype(jnp.float32)
    inter = jnp.sum(s * tb)
    smooth_f = jnp.asarray(smooth, jnp.float32)
    dice = (2.0 * inter + smooth_f) / (jnp.sum(s) + jnp.sum(tb) + smooth_f)
    return (1.0 - dice).astype(jnp.float32)


if __name__ == "__main__":
    key = jax.random.PRNGKey(0)
    k1, k2, k3, k4, k5, k6 = jax.random.split(key, 6)

    # Small shapes consistent with a segmentation head: (B, C, H, W) = (2, 4, 16, 16).
    inputs = jax.random.normal(k1, (2, 4, 16, 16), dtype=jnp.float32)            # logits
    targets = jax.random.randint(k2, (2, 4, 16, 16), minval=-1, maxval=3).astype(jnp.float32)

    loss = jax.block_until_ready(dice_loss(targets, inputs, smooth=1.0))
    ref = _dice_loss_ref(targets, inputs, smooth=1.0)
    assert jnp.allclose(loss, ref, atol=1e-5, rtol=1e-5), (loss, ref)

    # Ragged spatial shape (numel not a multiple of 128): exercises the copy-free
    # (rows, width=500) path, last-block row masking and the 2-core split.
    big_in = jax.random.normal(k3, (2, 1, 300, 500), dtype=jnp.float32)
    big_tg = (jax.random.uniform(k4, (2, 1, 300, 500)) > 0.5).astype(jnp.float32)
    big_loss = jax.block_until_ready(dice_loss(big_tg, big_in, smooth=1.0))
    big_ref = _dice_loss_ref(big_tg, big_in, smooth=1.0)
    assert jnp.allclose(big_loss, big_ref, atol=1e-4, rtol=1e-5), (big_loss, big_ref)

    # Narrow dtypes end-to-end (bf16 logits, int8 masks): in-kernel cast keeps the
    # HBM streams narrow; block rows rounded to the int8 sublane multiple.
    nb_in = jax.random.normal(k5, (4, 1, 128, 192), dtype=jnp.bfloat16)
    nb_tg = jax.random.randint(k6, (4, 1, 128, 192), minval=0, maxval=2).astype(jnp.int8)
    nb_loss = jax.block_until_ready(dice_loss(nb_tg, nb_in, smooth=1.0))
    nb_ref = _dice_loss_ref(nb_tg, nb_in, smooth=1.0)
    assert jnp.allclose(nb_loss, nb_ref, atol=2e-3, rtol=1e-3), (nb_loss, nb_ref)

    print("KERNEL_OK")
</pallas_src>

<mosaic_0001>
module attributes {stable_mosaic.version = 11 : i64} {
  func.func @_dice_sums_kernel(%arg0: i32, %arg1: i32, %arg2: memref<16x128xf32, #tpu.memory_space<vmem>>, %arg3: memref<16x128xf32, #tpu.memory_space<vmem>>, %arg4: memref<3x8x128xf32, #tpu.memory_space<vmem>>) attributes {dimension_semantics = [#tpu.dimension_semantics<parallel>, #tpu.dimension_semantics<arbitrary>], iteration_bounds = array<i64: 1, 1>, scalar_prefetch = 0 : i64, scratch_operands = 0 : i64, tpu.core_type = #tpu.core_type<tc>, window_params = [{transform_indices = @transform_0, window_bounds = array<i64: 16, 128>}, {transform_indices = @transform_1, window_bounds = array<i64: 16, 128>}, {transform_indices = @transform_2, window_bounds = array<i64: 3, 8, 128>}]} {
    %c0_i32 = arith.constant 0 : i32
    %0 = arith.cmpi eq, %arg1, %c0_i32 : i32
    %1 = arith.extui %0 : i1 to i32
    %c0_i32_0 = arith.constant 0 : i32
    %2 = arith.cmpi ne, %1, %c0_i32_0 : i32
    scf.if %2 {
      %cst_26 = arith.constant 0.000000e+00 : f32
      %41 = vector.broadcast %cst_26 : f32 to vector<3x8x128xf32>
      %c0_27 = arith.constant 0 : index
      %c0_28 = arith.constant 0 : index
      %c0_29 = arith.constant 0 : index
      %42 = vector.load %arg4[%c0_27, %c0_28, %c0_29] : memref<3x8x128xf32, #tpu.memory_space<vmem>>, vector<3x8x128xf32>
      tpu.vector_store %arg4[%c0_27, %c0_28, %c0_29], %41 {strides = array<i32>} : memref<3x8x128xf32, #tpu.memory_space<vmem>>, vector<3x8x128xf32>,
    } else {
    }
    %c0 = arith.constant 0 : index
    %c0_1 = arith.constant 0 : index
    %3 = vector.load %arg3[%c0, %c0_1] : memref<16x128xf32, #tpu.memory_space<vmem>>, vector<16x128xf32>
    %c0_2 = arith.constant 0 : index
    %c0_3 = arith.constant 0 : index
    %4 = vector.load %arg2[%c0_2, %c0_3] : memref<16x128xf32, #tpu.memory_space<vmem>>, vector<16x128xf32>
    %cst = arith.constant 5.000000e-01 : f32
    %5 = vector.broadcast %cst : f32 to vector<16x128xf32>
    %6 = arith.mulf %5, %3 : vector<16x128xf32>
    %7 = math.tanh %6 : vector<16x128xf32>
    %cst_4 = arith.constant 5.000000e-01 : f32
    %8 = vector.broadcast %cst_4 : f32 to vector<16x128xf32>
    %9 = arith.mulf %8, %7 : vector<16x128xf32>
    %cst_5 = arith.constant 5.000000e-01 : f32
    %10 = vector.broadcast %cst_5 : f32 to vector<16x128xf32>
    %11 = arith.addf %9, %10 : vector<16x128xf32>
    %cst_6 = arith.constant 0.000000e+00 : f32
    %12 = vector.broadcast %cst_6 : f32 to vector<16x128xf32>
    %13 = arith.cmpf ogt, %4, %12 : vector<16x128xf32>
    %14 = arith.extui %13 : vector<16x128xi1> to vector<16x128xi32>
    %15 = arith.sitofp %14 : vector<16x128xi32> to vector<16x128xf32>
    %c0_7 = arith.constant 0 : index
    %c0_8 = arith.constant 0 : index
    %c0_9 = arith.constant 0 : index
    %16 = vector.load %arg4[%c0_7, %c0_8, %c0_9] : memref<3x8x128xf32, #tpu.memory_space<vmem>>, vector<1x8x128xf32>
    %17 = vector.shape_cast %16 : vector<1x8x128xf32> to vector<8x128xf32>
    %18 = arith.mulf %11, %15 : vector<16x128xf32>
    %19 = vector.shape_cast %18 : vector<16x128xf32> to vector<2x8x128xf32>
    %cst_10 = arith.constant dense<0.000000e+00> : vector<8x128xf32>
    %20 = vector.multi_reduction <add>, %19, %cst_10 [0] : vector<2x8x128xf32> to vector<8x128xf32>
    %21 = arith.addf %17, %20 : vector<8x128xf32>
    %c0_11 = arith.constant 0 : index
    %c0_12 = arith.constant 0 : index
    %c0_13 = arith.constant 0 : index
    %22 = vector.load %arg4[%c0_11, %c0_12, %c0_13] : memref<3x8x128xf32, #tpu.memory_space<vmem>>, vector<1x8x128xf32>
    %23 = vector.shape_cast %22 : vector<1x8x128xf32> to vector<8x128xf32>
    %24 = vector.shape_cast %21 : vector<8x128xf32> to vector<1x8x128xf32>
    tpu.vector_store %arg4[%c0_11, %c0_12, %c0_13], %24 {strides = array<i32>} : memref<3x8x128xf32, #tpu.memory_space<vmem>>, vector<1x8x128xf32>,
    %c1 = arith.constant 1 : index
    %c0_14 = arith.constant 0 : index
    %c0_15 = arith.constant 0 : index
    %25 = vector.load %arg4[%c1, %c0_14, %c0_15] : memref<3x8x128xf32, #tpu.memory_space<vmem>>, vector<1x8x128xf32>
    %26 = vector.shape_cast %25 : vector<1x8x128xf32> to vector<8x128xf32>
    %27 = vector.shape_cast %11 : vector<16x128xf32> to vector<2x8x128xf32>
    %cst_16 = arith.constant dense<0.000000e+00> : vector<8x128xf32>
    %28 = vector.multi_reduction <add>, %27, %cst_16 [0] : vector<2x8x128xf32> to vector<8x128xf32>
    %29 = arith.addf %26, %28 : vector<8x128xf32>
    %c1_17 = arith.constant 1 : index
    %c0_18 = arith.constant 0 : index
    %c0_19 = arith.constant 0 : index
    %30 = vector.load %arg4[%c1_17, %c0_18, %c0_19] : memref<3x8x128xf32, #tpu.memory_space<vmem>>, vector<1x8x128xf32>
    %31 = vector.shape_cast %30 : vector<1x8x128xf32> to vector<8x128xf32>
    %32 = vector.shape_cast %29 : vector<8x128xf32> to vector<1x8x128xf32>
    tpu.vector_store %arg4[%c1_17, %c0_18, %c0_19], %32 {strides = array<i32>} : memref<3x8x128xf32, #tpu.memory_space<vmem>>, vector<1x8x128xf32>,
    %c2 = arith.constant 2 : index
    %c0_20 = arith.constant 0 : index
    %c0_21 = arith.constant 0 : index
    %33 = vector.load %arg4[%c2, %c0_20, %c0_21] : memref<3x8x128xf32, #tpu.memory_space<vmem>>, vector<1x8x128xf32>
    %34 = vector.shape_cast %33 : vector<1x8x128xf32> to vector<8x128xf32>
    %35 = vector.shape_cast %15 : vector<16x128xf32> to vector<2x8x128xf32>
    %cst_22 = arith.constant dense<0.000000e+00> : vector<8x128xf32>
    %36 = vector.multi_reduction <add>, %35, %cst_22 [0] : vector<2x8x128xf32> to vector<8x128xf32>
    %37 = arith.addf %34, %36 : vector<8x128xf32>
    %c2_23 = arith.constant 2 : index
    %c0_24 = arith.constant 0 : index
    %c0_25 = arith.constant 0 : index
    %38 = vector.load %arg4[%c2_23, %c0_24, %c0_25] : memref<3x8x128xf32, #tpu.memory_space<vmem>>, vector<1x8x128xf32>
    %39 = vector.shape_cast %38 : vector<1x8x128xf32> to vector<8x128xf32>
    %40 = vector.shape_cast %37 : vector<8x128xf32> to vector<1x8x128xf32>
    tpu.vector_store %arg4[%c2_23, %c0_24, %c0_25], %40 {strides = array<i32>} : memref<3x8x128xf32, #tpu.memory_space<vmem>>, vector<1x8x128xf32>,
    return
  }
  func.func @transform_0(%arg0: i32, %arg1: i32) -> (i32, i32) {
    %c1_i32 = arith.constant 1 : i32
    %0 = arith.muli %arg0, %c1_i32 : i32
    %1 = arith.addi %0, %arg1 : i32
    %c0_i32 = arith.constant 0 : i32
    %c0_i32_0 = arith.constant 0 : i32
    return %1, %c0_i32 : i32, i32
  }
  func.func @transform_1(%arg0: i32, %arg1: i32) -> (i32, i32) {
    %c1_i32 = arith.constant 1 : i32
    %0 = arith.muli %arg0, %c1_i32 : i32
    %1 = arith.addi %0, %arg1 : i32
    %c0_i32 = arith.constant 0 : i32
    %c0_i32_0 = arith.constant 0 : i32
    return %1, %c0_i32 : i32, i32
  }
  func.func @transform_2(%arg0: i32, %arg1: i32) -> (i32, i32, i32) {
    %c0_i32 = arith.constant 0 : i32
    %c0_i32_0 = arith.constant 0 : i32
    %c0_i32_1 = arith.constant 0 : i32
    return %arg0, %c0_i32, %c0_i32_0 : i32, i32, i32
  }
}

</mosaic_0001>

<llo_original>
// kernel: tpu_custom_call.1
$region0: #{tpu_custom_call.1}
  #allocation0 [shape = 'u32[]', space=smem, size = 0x4, offset = 0x4, fixed_abs, tag = 'smem constant byte address 0x4 - core index']
  #allocation1 [shape = 'u32[144,128]{1,0:T(1,128)}', space=vmem, size = 0x12000, scoped, tag = 'internal scratch']
  %s0 = inlined_call_operand.hbm [shape: f32[16,128], index: 0, kind: input, shape index: {}]
  %s1 = inlined_call_operand.hbm [shape: f32[16,128], index: 1, kind: input, shape index: {}]
  %s2 = inlined_call_operand.hbm [shape: f32[3,8,128], index: 2, kind: output, shape index: {}]
  %s3 = sld [smem:[#allocation0]]
  $region30: #{tpu_custom_call.1} parent=0
    _
  %s5 = ssub.s32 1, %s3
  %s6 = scalar_select 0, %s5, %s3
  $region1: #{tpu_custom_call.1} parent=0
    #allocation2 [shape = 'u8[8192]{0}', space=vmem, size = 0x2000, scoped, tag = 'input window, operand 0, single buffered']
    #allocation3 [shape = 's32[1]{0}', space=sflag, size = 0x4, scoped, tag = 'scoped memory for tpu_custom_call.1']
    #allocation4 [shape = 's32[1]{0}', space=sflag, size = 0x4, scoped, tag = 'scoped memory for tpu_custom_call.1']
    #allocation5 [shape = 'u8[8192]{0}', space=vmem, size = 0x2000, scoped, tag = 'input window, operand 1, single buffered']
    #allocation6 [shape = 's32[1]{0}', space=sflag, size = 0x4, scoped, tag = 'scoped memory for tpu_custom_call.1']
    #allocation7 [shape = 'u8[12288]{0}', space=vmem, size = 0x3000, scoped, tag = 'output window, operand 0, single buffered']
    %7 = vsyncpa [#allocation3], 0
    %8 = vsyncpa [#allocation6], 0
    %9 = vsyncpa [#allocation4], 0
    // Predicated region
    $region2: #{tpu_custom_call.1} parent=1 // pred_check
      _
    $region3: #{tpu_custom_call.1} parent=1 // pred_check_branch
      %11 = sbr.rel (0) target = $region5
    $region4: #{tpu_custom_call.1} parent=1 // pred_region
      %s12 = sadd.s32 0, 0
      %s13 = smul.u32 2, %s12
      %s15 = ssub.s32 256, 256
      %16 = vsyncadd [#allocation3], %s15
      %s17 = smul.addr %s13, 128
      %s18 = scalar_lea.hbm %s0, %s17
      %s19 = sshll.u32 [#allocation2], 4
      %s20 = int_to_ptr.vmem [resolvable:$true] %s19
      %25 = dma.hbm_to_vmem [thread:$0]  %s18, 256, %s20, [#allocation3], 128, 128, 8
    $region5: #{tpu_custom_call.1} parent=1 // pred_fallthru
      _
    // Predicated region
    $region6: #{tpu_custom_call.1} parent=1 // pred_check
      _
    $region7: #{tpu_custom_call.1} parent=1 // pred_check_branch
      %27 = sbr.rel (0) target = $region9
    $region8: #{tpu_custom_call.1} parent=1 // pred_region
      %s28 = sadd.s32 0, 0
      %s29 = smul.u32 2, %s28
      %s31 = ssub.s32 256, 256
      %32 = vsyncadd [#allocation6], %s31
      %s33 = smul.addr %s29, 128
      %s34 = scalar_lea.hbm %s1, %s33
      %s35 = sshll.u32 [#allocation5], 4
      %s36 = int_to_ptr.vmem [resolvable:$true] %s35
      %41 = dma.hbm_to_vmem [thread:$0]  %s34, 256, %s36, [#allocation6], 128, 128, 8
    $region9: #{tpu_custom_call.1} parent=1 // pred_fallthru
      _
    // Predicated region
    $region10: #{tpu_custom_call.1} parent=1 // pred_check
      _
    $region11: #{tpu_custom_call.1} parent=1 // pred_check_branch
      %43 = sbr.rel (0) target = $region13
    $region12: #{tpu_custom_call.1} parent=1 // pred_region
      %44 = dma.done [#allocation3], 256
    $region13: #{tpu_custom_call.1} parent=1 // pred_fallthru
      _
    // Predicated region
    $region14: #{tpu_custom_call.1} parent=1 // pred_check
      _
    $region15: #{tpu_custom_call.1} parent=1 // pred_check_branch
      %46 = sbr.rel (0) target = $region17
    $region16: #{tpu_custom_call.1} parent=1 // pred_region
      %47 = dma.done [#allocation6], 256
    $region17: #{tpu_custom_call.1} parent=1 // pred_fallthru
      _
    %s48 = sadd.s32 0, 0
    %s49 = smul.u32 2, %s48
    %s50 = sadd.s32 0, 0
    %s51 = smul.u32 2, %s50
    %p52 = scmp.eq.s32.totalorder 0, 0
    // Predicated region
    $region18: #{tpu_custom_call.1} parent=1 // pred_check
      %p53 = pneg %p52
    $region19: #{tpu_custom_call.1} parent=1 // pred_check_branch
      %55 = sbr.rel (%p53) target = $region21
    $region20: #{tpu_custom_call.1} parent=1 // pred_region
      %56 = vst [vmem:[#allocation7] sm:$0xff] 0.0
      %57 = vst [vmem:[#allocation7 + $0x8] sm:$0xff] 0.0
      %58 = vst [vmem:[#allocation7 + $0x10] sm:$0xff] 0.0
    $region21: #{tpu_custom_call.1} parent=1 // pred_fallthru
      _
    %v59 = vld [vmem:[#allocation5] sm:$0xff]
    %v60 = vld [vmem:[#allocation5 + $0x8] sm:$0xff]
    %v61 = vld [vmem:[#allocation2] sm:$0xff]
    %v62 = vld [vmem:[#allocation2 + $0x8] sm:$0xff]
    %v63 = vmul.f32 %v59, 0.5
    %v64 = vmul.f32 %v60, 0.5
    %v65 = vtanh.pop %v63
    %v66 = vtanh.pop %v64
    %v67 = vmul.f32 %v65, 0.5
    %v68 = vmul.f32 %v66, 0.5
    %v69 = vadd.f32 %v67, 0.5
    %v70 = vadd.f32 %v68, 0.5
    %vm71 = vcmp.gt.f32.partialorder %v61, 0.0
    %vm72 = vcmp.gt.f32.partialorder %v62, 0.0
    %v73 = vsel %vm71, 1, 0
    %v74 = vsel %vm72, 1, 0
    %v75 = vcvt.s32.f32 %v73
    %v76 = vcvt.s32.f32 %v74
    %v77 = vld [vmem:[#allocation7] sm:$0xff]
    %v78 = vmul.f32 %v69, %v75
    %v79 = vmul.f32 %v70, %v76
    %v80 = vadd.f32 %v78, %v79
    %v81 = vadd.f32 %v77, %v80
    %82 = vst [vmem:[#allocation7] sm:$0xff] %v81
    %s83 = scalar_lea.vmem [#allocation7], 8
    %v84 = vld [vmem:[%s83] sm:$0xff]
    %v85 = vadd.f32 %v69, %v70
    %v86 = vadd.f32 %v84, %v85
    %87 = vst [vmem:[%s83] sm:$0xff] %v86
    %s88 = scalar_lea.vmem [#allocation7], 16
    %v89 = vld [vmem:[%s88] sm:$0xff]
    %v90 = vadd.f32 %v75, %v76
    %v91 = vadd.f32 %v89, %v90
    %92 = vst [vmem:[%s88] sm:$0xff] %v91
    // Predicated region
    $region22: #{tpu_custom_call.1} parent=1 // pred_check
      _
    $region23: #{tpu_custom_call.1} parent=1 // pred_check_branch
      %94 = sbr.rel (0) target = $region25
    $region24: #{tpu_custom_call.1} parent=1 // pred_region
      %s96 = ssub.s32 384, 384
      %97 = vsyncadd [#allocation4], %s96
      %s98 = sshll.u32 [#allocation7], 4
      %s99 = int_to_ptr.vmem [resolvable:$true] %s98
      %104 = dma.vmem_to_hbm [thread:$0]  %s99, 384, %s2, [#allocation4], 128, 128, 8
    $region25: #{tpu_custom_call.1} parent=1 // pred_fallthru
      _
    // Predicated region
    $region26: #{tpu_custom_call.1} parent=1 // pred_check
      _
    $region27: #{tpu_custom_call.1} parent=1 // pred_check_branch
      %106 = sbr.rel (0) target = $region29
    $region28: #{tpu_custom_call.1} parent=1 // pred_region
      %107 = dma.done [#allocation4], 384
    $region29: #{tpu_custom_call.1} parent=1 // pred_fallthru
      _
    %108 = vsyncpa [#allocation3], 1
    %109 = vsyncpa [#allocation6], 1
    %110 = vsyncpa [#allocation4], 1

</llo_original>
